<compile_context>
chip_gen: v6e
topology: v6e:2x2x1
jax: 0.10.0
libtpu: 0.0.40
codegen_flags: <defaults>
</compile_context>

<pallas_src>
import functools

import jax
import jax.numpy as jnp
from jax.experimental import pallas as pl
from jax.experimental.pallas import tpu as pltpu


def _mlp_kernel(*refs, num_hidden, output_bound):
    """Fused MLP forward for one batch tile.

    refs = (x_ref,                                  # (TB, in_dim)        VMEM
            w0_ref, b0_ref, ..., w_{H-1}, b_{H-1},  # hidden layers       VMEM
            w_last_ref,                             # (1, H_last)         VMEM
            b_last_ref,                             # (1,) scalar         SMEM
            out_ref)                                # (1, 1, TB)          VMEM
    """
    x_ref = refs[0]
    out_ref = refs[-1]
    params = refs[1:-1]

    h = x_ref[...]                                  # (TB, in_dim)
    for li in range(num_hidden):
        w = params[2 * li][...]                     # (in_i, out_i)
        b = params[2 * li + 1][...]                 # (1, out_i) f32
        y = jnp.dot(h.astype(w.dtype), w,
                    preferred_element_type=jnp.float32) + b.astype(jnp.float32)
        h = jnp.maximum(y, 0.0)                     # ReLU on hidden layers (f32)

    w_last = params[2 * num_hidden][...]            # (1, H_last)
    b_last = params[2 * num_hidden + 1][0]          # scalar from SMEM
    # (1,H) . (TB,H)^T -> (1,TB): lane-dense output row (no N=1 matmul, no masked
    # (TB,1) store, no relayout needed before the store).
    y_row = jnp.einsum("oh,bh->ob", w_last, h.astype(w_last.dtype),
                       preferred_element_type=jnp.float32)
    out_ref[0] = (output_bound * jnp.tanh(y_row + b_last)).astype(out_ref.dtype)


def _round_up(n, m):
    return ((n + m - 1) // m) * m


def sparse_nn_forward(x, weights, biases, output_bound=1.0,
                      block_batch=256, use_bf16=False):
    """Run the fused MLP Pallas kernel.

    x:       (B, input_dim) float32
    weights: list of (in_i, out_i) float32 arrays (transposed vs. torch's (out,in))
    biases:  list of (out_i,) float32 arrays; last layer must have out == 1
    """
    num_layers = len(weights)
    num_hidden = num_layers - 1
    B, in_dim = x.shape
    assert weights[-1].shape[1] == 1, "final layer must have out_features == 1"

    # Batch tile: multiple of 8 (sublane); pad B up to a multiple of TB.
    TB = _round_up(min(int(block_batch), _round_up(B, 8)), 8)
    B_pad = _round_up(B, TB)
    G = B_pad // TB

    param_dtype = jnp.bfloat16 if use_bf16 else jnp.float32
    x_in = x.astype(param_dtype)
    if B_pad != B:
        x_in = jnp.pad(x_in, ((0, B_pad - B), (0, 0)))

    operands = [x_in]
    in_specs = [pl.BlockSpec((TB, in_dim), lambda i: (i, 0))]

    # Hidden layers: weights (in,out) + biases (1,out), VMEM-resident (constant maps).
    for li in range(num_hidden):
        w = weights[li].astype(param_dtype)
        b = biases[li].astype(jnp.float32).reshape(1, -1)
        operands.extend([w, b])
        in_specs.append(pl.BlockSpec(w.shape, lambda i: (0, 0)))
        in_specs.append(pl.BlockSpec(b.shape, lambda i: (0, 0)))

    # Final layer: weight as a (1, H_last) row; scalar bias via SMEM.
    w_last = weights[-1].astype(param_dtype).reshape(1, -1)
    b_last = biases[-1].astype(jnp.float32).reshape(1)
    operands.extend([w_last, b_last])
    in_specs.append(pl.BlockSpec(w_last.shape, lambda i: (0, 0)))
    in_specs.append(pl.BlockSpec(memory_space=pltpu.MemorySpace.SMEM))

    out_spec = pl.BlockSpec((1, 1, TB), lambda i: (i, 0, 0))

    kernel = functools.partial(_mlp_kernel, num_hidden=num_hidden,
                               output_bound=float(output_bound))

    out3 = pl.pallas_call(
        kernel,
        out_shape=jax.ShapeDtypeStruct((G, 1, TB), jnp.float32),
        grid_spec=pltpu.PrefetchScalarGridSpec(
            num_scalar_prefetch=0,
            grid=(G,),
            in_specs=in_specs,
            out_specs=out_spec,
        ),
        compiler_params=pltpu.CompilerParams(
            dimension_semantics=("parallel",)),   # shards batch tiles across v7x's 2 TCs
    )(*operands)

    # (G, 1, TB) lane-dense buffer -> (B, 1)
    return out3.reshape(B_pad)[:B].reshape(B, 1)


def init_params(key, input_dim, hidden_layers):
    """Kaiming-normal (fan_in, gain sqrt(2)) weights, zero biases; weights are (in, out)."""
    layer_sizes = [input_dim] + list(hidden_layers) + [1]
    weights, biases = [], []
    for i in range(len(layer_sizes) - 1):
        fan_in, fan_out = layer_sizes[i], layer_sizes[i + 1]
        key, sub = jax.random.split(key)
        std = (2.0 / fan_in) ** 0.5
        weights.append(std * jax.random.normal(sub, (fan_in, fan_out), dtype=jnp.float32))
        biases.append(jnp.zeros((fan_out,), dtype=jnp.float32))
    return weights, biases


def reference_forward(x, weights, biases, output_bound=1.0):
    h = x
    for i, (w, b) in enumerate(zip(weights, biases)):
        y = h @ w + b
        h = jnp.maximum(y, 0.0) if i < len(weights) - 1 else output_bound * jnp.tanh(y)
    return h


if __name__ == "__main__":
    key = jax.random.PRNGKey(0)

    input_dim = 16
    hidden_layers = [32, 32]
    output_bound = 1.0

    key, pkey, xkey1, xkey2 = jax.random.split(key, 4)
    weights, biases = init_params(pkey, input_dim, hidden_layers)

    # 1) small batch: single grid step, full-array blocks.
    x_small = jax.random.normal(xkey1, (8, input_dim), dtype=jnp.float32)
    out_small = jax.block_until_ready(
        sparse_nn_forward(x_small, weights, biases, output_bound))
    ref_small = reference_forward(x_small, weights, biases, output_bound)
    assert out_small.shape == (8, 1), out_small.shape
    assert jnp.allclose(out_small, ref_small, atol=2e-5, rtol=2e-5)

    # 2) batch grid with padding: B=300 -> 3 tiles of 128 (last tile padded).
    x_big = jax.random.normal(xkey2, (300, input_dim), dtype=jnp.float32)
    out_big = jax.block_until_ready(
        sparse_nn_forward(x_big, weights, biases, output_bound, block_batch=128))
    ref_big = reference_forward(x_big, weights, biases, output_bound)
    assert out_big.shape == (300, 1), out_big.shape
    assert jnp.allclose(out_big, ref_big, atol=2e-5, rtol=2e-5)

    # 3) bf16 weights/activations (v6e/v7x MXU path), f32 accumulation.
    out_bf16 = jax.block_until_ready(
        sparse_nn_forward(x_big, weights, biases, output_bound,
                          block_batch=128, use_bf16=True))
    assert jnp.allclose(out_bf16, ref_big, atol=5e-2, rtol=5e-2)

    # TODO(synk): prune_weights / apply_masks / count_parameters are training-time
    # pruning utilities (quantile thresholding of weights); they do not change the
    # forward pass and are left to the host-side JAX caller.

    print("KERNEL_OK")
</pallas_src>

<mosaic_0001>
module attributes {stable_mosaic.version = 11 : i64} {
  func.func @_mlp_kernel(%arg0: i32, %arg1: memref<8x16xf32, #tpu.memory_space<vmem>>, %arg2: memref<16x32xf32, #tpu.memory_space<vmem>>, %arg3: memref<1x32xf32, #tpu.memory_space<vmem>>, %arg4: memref<32x32xf32, #tpu.memory_space<vmem>>, %arg5: memref<1x32xf32, #tpu.memory_space<vmem>>, %arg6: memref<1x32xf32, #tpu.memory_space<vmem>>, %arg7: memref<1xf32, #tpu.memory_space<smem>>, %arg8: memref<1x1x8xf32, #tpu.memory_space<vmem>>) attributes {dimension_semantics = [#tpu.dimension_semantics<parallel>], iteration_bounds = array<i64: 1>, scalar_prefetch = 0 : i64, scratch_operands = 0 : i64, tpu.core_type = #tpu.core_type<tc>, window_params = [{transform_indices = @transform_0, window_bounds = array<i64: 8, 16>}, {pipeline_mode = #tpu.pipeline_mode<synchronous>, transform_indices = @transform_1, window_bounds = array<i64: 16, 32>}, {pipeline_mode = #tpu.pipeline_mode<synchronous>, transform_indices = @transform_2, window_bounds = array<i64: 1, 32>}, {pipeline_mode = #tpu.pipeline_mode<synchronous>, transform_indices = @transform_3, window_bounds = array<i64: 32, 32>}, {pipeline_mode = #tpu.pipeline_mode<synchronous>, transform_indices = @transform_4, window_bounds = array<i64: 1, 32>}, {pipeline_mode = #tpu.pipeline_mode<synchronous>, transform_indices = @transform_5, window_bounds = array<i64: 1, 32>}, {transform_indices = @transform_6, window_bounds = array<i64: 1>}, {transform_indices = @transform_7, window_bounds = array<i64: 1, 1, 8>}]} {
    %c0 = arith.constant 0 : index
    %c0_0 = arith.constant 0 : index
    %0 = vector.load %arg1[%c0, %c0_0] : memref<8x16xf32, #tpu.memory_space<vmem>>, vector<8x16xf32>
    %c0_1 = arith.constant 0 : index
    %c0_2 = arith.constant 0 : index
    %1 = vector.load %arg2[%c0_1, %c0_2] : memref<16x32xf32, #tpu.memory_space<vmem>>, vector<16x32xf32>
    %c0_3 = arith.constant 0 : index
    %c0_4 = arith.constant 0 : index
    %2 = vector.load %arg3[%c0_3, %c0_4] : memref<1x32xf32, #tpu.memory_space<vmem>>, vector<1x32xf32>
    %cst = arith.constant dense<0.000000e+00> : vector<8x32xf32>
    %3 = tpu.matmul %0, %1, %cst {dimension_numbers = #tpu.dot_dimension_numbers<[1], [0], [0], [1], [0, 0, 1, 1], [], []>} : vector<8x16xf32>, vector<16x32xf32>, vector<8x32xf32> -> vector<8x32xf32>
    %4 = vector.broadcast %2 : vector<1x32xf32> to vector<8x32xf32>
    %5 = arith.addf %3, %4 : vector<8x32xf32>
    %cst_5 = arith.constant 0.000000e+00 : f32
    %6 = vector.broadcast %cst_5 : f32 to vector<8x32xf32>
    %7 = arith.maximumf %5, %6 : vector<8x32xf32>
    %c0_6 = arith.constant 0 : index
    %c0_7 = arith.constant 0 : index
    %8 = vector.load %arg4[%c0_6, %c0_7] : memref<32x32xf32, #tpu.memory_space<vmem>>, vector<32x32xf32>
    %c0_8 = arith.constant 0 : index
    %c0_9 = arith.constant 0 : index
    %9 = vector.load %arg5[%c0_8, %c0_9] : memref<1x32xf32, #tpu.memory_space<vmem>>, vector<1x32xf32>
    %cst_10 = arith.constant dense<0.000000e+00> : vector<8x32xf32>
    %10 = tpu.matmul %7, %8, %cst_10 {dimension_numbers = #tpu.dot_dimension_numbers<[1], [0], [0], [1], [0, 0, 1, 1], [], []>} : vector<8x32xf32>, vector<32x32xf32>, vector<8x32xf32> -> vector<8x32xf32>
    %11 = vector.broadcast %9 : vector<1x32xf32> to vector<8x32xf32>
    %12 = arith.addf %10, %11 : vector<8x32xf32>
    %cst_11 = arith.constant 0.000000e+00 : f32
    %13 = vector.broadcast %cst_11 : f32 to vector<8x32xf32>
    %14 = arith.maximumf %12, %13 : vector<8x32xf32>
    %c0_12 = arith.constant 0 : index
    %c0_13 = arith.constant 0 : index
    %15 = vector.load %arg6[%c0_12, %c0_13] : memref<1x32xf32, #tpu.memory_space<vmem>>, vector<1x32xf32>
    %c0_14 = arith.constant 0 : index
    %16 = memref.load %arg7[%c0_14] : memref<1xf32, #tpu.memory_space<smem>>
    "tpu.trace_start"() <{level = 10 : i32, message = "oh,bh->ob"}> : () -> ()
    %cst_15 = arith.constant dense<0.000000e+00> : vector<1x8xf32>
    %17 = tpu.matmul %15, %14, %cst_15 {dimension_numbers = #tpu.dot_dimension_numbers<[1], [1], [0], [0], [0, 0, 1, 0], [], []>} : vector<1x32xf32>, vector<8x32xf32>, vector<1x8xf32> -> vector<1x8xf32>
    "tpu.trace_stop"() : () -> ()
    %18 = vector.broadcast %16 : f32 to vector<1x8xf32>
    %19 = arith.addf %17, %18 : vector<1x8xf32>
    %20 = math.tanh %19 : vector<1x8xf32>
    %cst_16 = arith.constant 1.000000e+00 : f32
    %21 = vector.broadcast %cst_16 : f32 to vector<1x8xf32>
    %22 = arith.mulf %21, %20 : vector<1x8xf32>
    %c0_17 = arith.constant 0 : index
    %c0_18 = arith.constant 0 : index
    %c0_19 = arith.constant 0 : index
    %23 = vector.load %arg8[%c0_17, %c0_18, %c0_19] : memref<1x1x8xf32, #tpu.memory_space<vmem>>, vector<1x1x8xf32>
    %24 = vector.shape_cast %23 : vector<1x1x8xf32> to vector<1x8xf32>
    %25 = vector.shape_cast %22 : vector<1x8xf32> to vector<1x1x8xf32>
    tpu.vector_store %arg8[%c0_17, %c0_18, %c0_19], %25 {strides = array<i32>} : memref<1x1x8xf32, #tpu.memory_space<vmem>>, vector<1x1x8xf32>,
    return
  }
  func.func @transform_0(%arg0: i32) -> (i32, i32) {
    %c0_i32 = arith.constant 0 : i32
    %c0_i32_0 = arith.constant 0 : i32
    return %arg0, %c0_i32 : i32, i32
  }
  func.func @transform_1(%arg0: i32) -> (i32, i32) {
    %c0_i32 = arith.constant 0 : i32
    %c0_i32_0 = arith.constant 0 : i32
    %c0_i32_1 = arith.constant 0 : i32
    return %c0_i32, %c0_i32_0 : i32, i32
  }
  func.func @transform_2(%arg0: i32) -> (i32, i32) {
    %c0_i32 = arith.constant 0 : i32
    %c0_i32_0 = arith.constant 0 : i32
    %c0_i32_1 = arith.constant 0 : i32
    return %c0_i32, %c0_i32_0 : i32, i32
  }
  func.func @transform_3(%arg0: i32) -> (i32, i32) {
    %c0_i32 = arith.constant 0 : i32
    %c0_i32_0 = arith.constant 0 : i32
    %c0_i32_1 = arith.constant 0 : i32
    return %c0_i32, %c0_i32_0 : i32, i32
  }
  func.func @transform_4(%arg0: i32) -> (i32, i32) {
    %c0_i32 = arith.constant 0 : i32
    %c0_i32_0 = arith.constant 0 : i32
    %c0_i32_1 = arith.constant 0 : i32
    return %c0_i32, %c0_i32_0 : i32, i32
  }
  func.func @transform_5(%arg0: i32) -> (i32, i32) {
    %c0_i32 = arith.constant 0 : i32
    %c0_i32_0 = arith.constant 0 : i32
    %c0_i32_1 = arith.constant 0 : i32
    return %c0_i32, %c0_i32_0 : i32, i32
  }
  func.func @transform_6(%arg0: i32) -> i32 {
    %c0_i32 = arith.constant 0 : i32
    %c0_i32_0 = arith.constant 0 : i32
    return %c0_i32 : i32
  }
  func.func @transform_7(%arg0: i32) -> (i32, i32, i32) {
    %c0_i32 = arith.constant 0 : i32
    %c0_i32_0 = arith.constant 0 : i32
    %c0_i32_1 = arith.constant 0 : i32
    return %arg0, %c0_i32, %c0_i32_0 : i32, i32, i32
  }
}

</mosaic_0001>

<llo_original>
// kernel: tpu_custom_call.1
$region0: #{tpu_custom_call.1}
  #allocation0 [shape = 'u32[]', space=smem, size = 0x4, offset = 0x4, fixed_abs, tag = 'smem constant byte address 0x4 - core index']
  #allocation1 [shape = 'u32[144,128]{1,0:T(1,128)}', space=vmem, size = 0x12000, scoped, tag = 'internal scratch']
  #allocation2 [shape = 'f32[1]{0:T(128)S(6)}', space=smem, size = 0x200, scoped, tag = 'scoped memory for tpu_custom_call.1']
  %s0 = inlined_call_operand.hbm [shape: f32[8,16], index: 0, kind: input, shape index: {}]
  %s1 = inlined_call_operand.hbm [shape: f32[16,32], index: 1, kind: input, shape index: {}]
  %s2 = inlined_call_operand.vmem [shape: f32[1,32], index: 2, kind: input, shape index: {}]
  %s3 = inlined_call_operand.hbm [shape: f32[32,32], index: 3, kind: input, shape index: {}]
  %s4 = inlined_call_operand.vmem [shape: f32[1,32], index: 4, kind: input, shape index: {}]
  %s5 = inlined_call_operand.vmem [shape: f32[1,32], index: 5, kind: input, shape index: {}]
  %s6 = inlined_call_operand.<no memory space> [shape: f32[1], index: 6, kind: input, shape index: {}]
  %s7 = inlined_call_operand.hbm [shape: f32[1,1,8], index: 7, kind: output, shape index: {}]
  %s8 = sld [smem:[#allocation0]]
  $region50: #{tpu_custom_call.1} parent=0
    _
  %s10 = ssub.s32 1, %s8
  %s11 = scalar_select 0, %s10, %s8
  %12 = sst [smem:[#allocation2]] %s6
  $region1: #{tpu_custom_call.1} parent=0
    #allocation3 [shape = 'u8[4096]{0}', space=vmem, size = 0x1000, scoped, tag = 'input window, operand 0, single buffered']
    #allocation4 [shape = 's32[1]{0}', space=sflag, size = 0x4, scoped, tag = 'scoped memory for tpu_custom_call.1']
    #allocation5 [shape = 's32[1]{0}', space=sflag, size = 0x4, scoped, tag = 'scoped memory for tpu_custom_call.1']
    #allocation6 [shape = 'u8[8192]{0}', space=vmem, size = 0x2000, scoped, tag = 'input window, operand 1, single buffered']
    #allocation7 [shape = 's32[1]{0}', space=sflag, size = 0x4, scoped, tag = 'scoped memory for tpu_custom_call.1']
    #allocation8 [shape = 'u8[16384]{0}', space=vmem, size = 0x4000, scoped, tag = 'input window, operand 3, single buffered']
    #allocation9 [shape = 'u8[512]{0}', space=vmem, size = 0x400, scoped, tag = 'output window, operand 0, single buffered']
    %13 = vsyncpa [#allocation4], 0
    %14 = vsyncpa [#allocation7], 0
    %15 = vsyncpa [#allocation5], 0
    // Predicated region
    $region2: #{tpu_custom_call.1} parent=1 // pred_check
      _
    $region3: #{tpu_custom_call.1} parent=1 // pred_check_branch
      %17 = sbr.rel (0) target = $region5
    $region4: #{tpu_custom_call.1} parent=1 // pred_region
      %s19 = ssub.s32 128, 128
      %20 = vsyncadd [#allocation4], %s19
      %s22 = sshll.u32 [#allocation3], 4
      %s23 = int_to_ptr.vmem [resolvable:$true] %s22
      %25 = dma.hbm_to_vmem [thread:$0]  %s0, 128, %s23, [#allocation4]
    $region5: #{tpu_custom_call.1} parent=1 // pred_fallthru
      _
    // Predicated region
    $region6: #{tpu_custom_call.1} parent=1 // pred_check
      _
    $region7: #{tpu_custom_call.1} parent=1 // pred_check_branch
      %27 = sbr.rel (0) target = $region9
    $region8: #{tpu_custom_call.1} parent=1 // pred_region
      %s29 = ssub.s32 256, 256
      %30 = vsyncadd [#allocation7], %s29
      %s31 = sshll.u32 [#allocation6], 4
      %s32 = int_to_ptr.vmem [resolvable:$true] %s31
      %37 = dma.hbm_to_vmem [thread:$0]  %s1, 256, %s32, [#allocation7], 128, 128, 8
    $region9: #{tpu_custom_call.1} parent=1 // pred_fallthru
      _
    // Predicated region
    $region10: #{tpu_custom_call.1} parent=1 // pred_check
      _
    $region11: #{tpu_custom_call.1} parent=1 // pred_check_branch
      %39 = sbr.rel (0) target = $region13
    $region12: #{tpu_custom_call.1} parent=1 // pred_region
      _
    $region13: #{tpu_custom_call.1} parent=1 // pred_fallthru
      _
    // Predicated region
    $region14: #{tpu_custom_call.1} parent=1 // pred_check
      _
    $region15: #{tpu_custom_call.1} parent=1 // pred_check_branch
      %41 = sbr.rel (0) target = $region17
    $region16: #{tpu_custom_call.1} parent=1 // pred_region
      %s43 = ssub.s32 512, 512
      %44 = vsyncadd [#allocation7], %s43
      %s45 = sshll.u32 [#allocation8], 4
      %s46 = int_to_ptr.vmem [resolvable:$true] %s45
      %51 = dma.hbm_to_vmem [thread:$0]  %s3, 512, %s46, [#allocation7], 128, 128, 8
    $region17: #{tpu_custom_call.1} parent=1 // pred_fallthru
      _
    // Predicated region
    $region18: #{tpu_custom_call.1} parent=1 // pred_check
      _
    $region19: #{tpu_custom_call.1} parent=1 // pred_check_branch
      %53 = sbr.rel (0) target = $region21
    $region20: #{tpu_custom_call.1} parent=1 // pred_region
      _
    $region21: #{tpu_custom_call.1} parent=1 // pred_fallthru
      _
    // Predicated region
    $region22: #{tpu_custom_call.1} parent=1 // pred_check
      _
    $region23: #{tpu_custom_call.1} parent=1 // pred_check_branch
      %55 = sbr.rel (0) target = $region25
    $region24: #{tpu_custom_call.1} parent=1 // pred_region
      _
    $region25: #{tpu_custom_call.1} parent=1 // pred_fallthru
      _
    // Predicated region
    $region26: #{tpu_custom_call.1} parent=1 // pred_check
      _
    $region27: #{tpu_custom_call.1} parent=1 // pred_check_branch
      %57 = sbr.rel (0) target = $region29
    $region28: #{tpu_custom_call.1} parent=1 // pred_region
      _
    $region29: #{tpu_custom_call.1} parent=1 // pred_fallthru
      _
    // Predicated region
    $region30: #{tpu_custom_call.1} parent=1 // pred_check
      _
    $region31: #{tpu_custom_call.1} parent=1 // pred_check_branch
      %59 = sbr.rel (0) target = $region33
    $region32: #{tpu_custom_call.1} parent=1 // pred_region
      %60 = dma.done [#allocation4], 128
    $region33: #{tpu_custom_call.1} parent=1 // pred_fallthru
      _
    // Predicated region
    $region34: #{tpu_custom_call.1} parent=1 // pred_check
      _
    $region35: #{tpu_custom_call.1} parent=1 // pred_check_branch
      %62 = sbr.rel (0) target = $region37
    $region36: #{tpu_custom_call.1} parent=1 // pred_region
      %63 = dma.done [#allocation7], 256
    $region37: #{tpu_custom_call.1} parent=1 // pred_fallthru
      _
    // Predicated region
    $region38: #{tpu_custom_call.1} parent=1 // pred_check
      _
    $region39: #{tpu_custom_call.1} parent=1 // pred_check_branch
      %65 = sbr.rel (0) target = $region41
    $region40: #{tpu_custom_call.1} parent=1 // pred_region
      %66 = dma.done [#allocation7], 512
    $region41: #{tpu_custom_call.1} parent=1 // pred_fallthru
      _
    %v67 = vld [vmem:[#allocation3] sm:$0xff]
    %v68 = vld [vmem:[#allocation6] sm:$0xff]
    %v69 = vld [vmem:[#allocation6 + $0x8] sm:$0xff]
    %v70 = vld [vmem:[%s2] sm:$0x1]
    %v72 = vlaneseq
    %v73 = vshrl.u32 %v72, 7
    %v74 = vsub.s32 0, %v73
    %v75 = vrot.slane %v70, %v74
    %vm77 = vcmask 130048
    %v79 = vsel %vm77, %v67, 0
    %81 = vmatprep.subr.mxu0 0.0
    %82 = vmatpush1.msra.mxu0 0.0
    %83 = vmatprep.subr.mxu0 0.0
    %84 = vmatpush1.msra.mxu0 0.0
    %85 = vmatprep.subr.mxu0 0.0
    %86 = vmatpush1.msra.mxu0 0.0
    %87 = vmatprep.subr.mxu0 0.0
    %88 = vmatpush1.msra.mxu0 0.0
    %89 = vmatprep.subr.mxu0 0.0
    %90 = vmatpush1.msra.mxu0 0.0
    %91 = vmatprep.subr.mxu0 0.0
    %92 = vmatpush1.msra.mxu0 0.0
    %93 = vmatprep.subr.mxu0 0.0
    %94 = vmatpush1.msra.mxu0 0.0
    %95 = vmatprep.subr.mxu0 0.0
    %96 = vmatpush1.msra.mxu0 0.0
    %97 = vmatprep.subr.mxu0 0.0
    %98 = vmatpush1.msra.mxu0 0.0
    %99 = vmatprep.subr.mxu0 0.0
    %100 = vmatpush1.msra.mxu0 0.0
    %101 = vmatprep.subr.mxu0 0.0
    %102 = vmatpush1.msra.mxu0 0.0
    %103 = vmatprep.subr.mxu0 0.0
    %104 = vmatpush1.msra.mxu0 0.0
    %105 = vmatprep.subr.mxu0 0.0
    %106 = vmatpush1.msra.mxu0 0.0
    %107 = vmatprep.subr.mxu0 0.0
    %108 = vmatpush1.msra.mxu0 0.0
    %109 = vmatprep.subr.mxu0 0.0
    %110 = vmatpush1.msra.mxu0 %v69
    %111 = vmatprep.subr.mxu0 0.0
    %112 = vmatpush1.msra.mxu0 %v68
    %113 = vmatprep.subr.mxu0 0.0
    %114 = vmatpush2.msra.mxu0 0.0
    %115 = vmatprep.subr.mxu0 0.0
    %116 = vmatpush2.msra.mxu0 0.0
    %117 = vmatprep.subr.mxu0 0.0
    %118 = vmatpush2.msra.mxu0 0.0
    %119 = vmatprep.subr.mxu0 0.0
    %120 = vmatpush2.msra.mxu0 0.0
    %121 = vmatprep.subr.mxu0 0.0
    %122 = vmatpush2.msra.mxu0 0.0
    %123 = vmatprep.subr.mxu0 0.0
    %124 = vmatpush2.msra.mxu0 0.0
    %125 = vmatprep.subr.mxu0 0.0
    %126 = vmatpush2.msra.mxu0 0.0
    %127 = vmatprep.subr.mxu0 0.0
    %128 = vmatpush2.msra.mxu0 0.0
    %129 = vmatprep.subr.mxu0 0.0
    %130 = vmatpush2.msra.mxu0 0.0
    %131 = vmatprep.subr.mxu0 0.0
    %132 = vmatpush2.msra.mxu0 0.0
    %133 = vmatprep.subr.mxu0 0.0
    %134 = vmatpush2.msra.mxu0 0.0
    %135 = vmatprep.subr.mxu0 0.0
    %136 = vmatpush2.msra.mxu0 0.0
    %137 = vmatprep.subr.mxu0 0.0
    %138 = vmatpush2.msra.mxu0 0.0
    %139 = vmatprep.subr.mxu0 0.0
    %140 = vmatpush2.msra.mxu0 0.0
    %141 = vmatprep.subr.mxu0 0.0
    %142 = vmatpush2.msra.mxu0 0.0
    %143 = vmatprep.subr.mxu0 0.0
    %144 = vmatpush2.msra.mxu0 0.0
    %145 = vmatprep.mubr.f32.mxu0 0.0
    %146 = vmatmul.mubr.f32.gmra.mxu0 %v79
    %v147 = vpop.f32.mrf.mxu0
    %v148 = vadd.f32 %v75, %v147
    %v149 = vpop.f32.mrf.mxu0
    %150 = vdwg.mxu0
    %v151 = vmax.f32 %v148, 0.0
    %v152 = vld [vmem:[#allocation8] sm:$0xff]
    %v153 = vld [vmem:[#allocation8 + $0x8] sm:$0xff]
    %v154 = vld [vmem:[#allocation8 + $0x10] sm:$0xff]
    %v155 = vld [vmem:[#allocation8 + $0x18] sm:$0xff]
    %v156 = vld [vmem:[%s4] sm:$0x1]
    %v158 = vlaneseq
    %v159 = vshrl.u32 %v158, 7
    %v160 = vsub.s32 0, %v159
    %v161 = vrot.slane %v156, %v160
    %vm163 = vcmask 261120
    %v165 = vsel %vm163, %v151, 0
    %167 = vmatprep.subr.mxu0 0.0
    %168 = vmatpush1.msra.mxu0 0.0
    %169 = vmatprep.subr.mxu0 0.0
    %170 = vmatpush1.msra.mxu0 0.0
    %171 = vmatprep.subr.mxu0 0.0
    %172 = vmatpush1.msra.mxu0 0.0
    %173 = vmatprep.subr.mxu0 0.0
    %174 = vmatpush1.msra.mxu0 0.0
    %175 = vmatprep.subr.mxu0 0.0
    %176 = vmatpush1.msra.mxu0 0.0
    %177 = vmatprep.subr.mxu0 0.0
    %178 = vmatpush1.msra.mxu0 0.0
    %179 = vmatprep.subr.mxu0 0.0
    %180 = vmatpush1.msra.mxu0 0.0
    %181 = vmatprep.subr.mxu0 0.0
    %182 = vmatpush1.msra.mxu0 0.0
    %183 = vmatprep.subr.mxu0 0.0
    %184 = vmatpush1.msra.mxu0 0.0
    %185 = vmatprep.subr.mxu0 0.0
    %186 = vmatpush1.msra.mxu0 0.0
    %187 = vmatprep.subr.mxu0 0.0
    %188 = vmatpush1.msra.mxu0 0.0
    %189 = vmatprep.subr.mxu0 0.0
    %190 = vmatpush1.msra.mxu0 0.0
    %191 = vmatprep.subr.mxu0 0.0
    %192 = vmatpush1.msra.mxu0 %v155
    %193 = vmatprep.subr.mxu0 0.0
    %194 = vmatpush1.msra.mxu0 %v154
    %195 = vmatprep.subr.mxu0 0.0
    %196 = vmatpush1.msra.mxu0 %v153
    %197 = vmatprep.subr.mxu0 0.0
    %198 = vmatpush1.msra.mxu0 %v152
    %199 = vmatprep.subr.mxu0 0.0
    %200 = vmatpush2.msra.mxu0 0.0
    %201 = vmatprep.subr.mxu0 0.0
    %202 = vmatpush2.msra.mxu0 0.0
    %203 = vmatprep.subr.mxu0 0.0
    %204 = vmatpush2.msra.mxu0 0.0
    %205 = vmatprep.subr.mxu0 0.0
    %206 = vmatpush2.msra.mxu0 0.0
    %207 = vmatprep.subr.mxu0 0.0
    %208 = vmatpush2.msra.mxu0 0.0
    %209 = vmatprep.subr.mxu0 0.0
    %210 = vmatpush2.msra.mxu0 0.0
    %211 = vmatprep.subr.mxu0 0.0
    %212 = vmatpush2.msra.mxu0 0.0
    %213 = vmatprep.subr.mxu0 0.0
    %214 = vmatpush2.msra.mxu0 0.0
    %215 = vmatprep.subr.mxu0 0.0
    %216 = vmatpush2.msra.mxu0 0.0
    %217 = vmatprep.subr.mxu0 0.0
    %218 = vmatpush2.msra.mxu0 0.0
    %219 = vmatprep.subr.mxu0 0.0
    %220 = vmatpush2.msra.mxu0 0.0
    %221 = vmatprep.subr.mxu0 0.0
    %222 = vmatpush2.msra.mxu0 0.0
    %223 = vmatprep.subr.mxu0 0.0
    %224 = vmatpush2.msra.mxu0 0.0
    %225 = vmatprep.subr.mxu0 0.0
    %226 = vmatpush2.msra.mxu0 0.0
    %227 = vmatprep.subr.mxu0 0.0
    %228 = vmatpush2.msra.mxu0 0.0
    %229 = vmatprep.subr.mxu0 0.0
    %230 = vmatpush2.msra.mxu0 0.0
    %231 = vmatprep.mubr.f32.mxu0 0.0
    %232 = vmatmul.mubr.f32.gmra.mxu0 %v165
    %v233 = vpop.f32.mrf.mxu0
    %v234 = vadd.f32 %v161, %v233
    %v235 = vpop.f32.mrf.mxu0
    %236 = vdwg.mxu0
    %v237 = vmax.f32 %v234, 0.0
    %v238 = vld [vmem:[%s5] sm:$0x1]
    %s239 = sld [smem:[#allocation2]]
    %v240 = vstv %s239
    %v242 = vsel %vm163, %v238, 0
    %v245 = vsel %vm163, %v237, 0
    %247 = vmatprep.subr.mxu0 0.0
    %248 = vmatpush1.xpose.msra.mxu0 0.0
    %249 = vmatprep.subr.mxu0 0.0
    %250 = vmatpush1.xpose.msra.mxu0 0.0
    %251 = vmatprep.subr.mxu0 0.0
    %252 = vmatpush1.xpose.msra.mxu0 0.0
    %253 = vmatprep.subr.mxu0 0.0
    %254 = vmatpush1.xpose.msra.mxu0 0.0
    %255 = vmatprep.subr.mxu0 0.0
    %256 = vmatpush1.xpose.msra.mxu0 0.0
    %257 = vmatprep.subr.mxu0 0.0
    %258 = vmatpush1.xpose.msra.mxu0 0.0
    %259 = vmatprep.subr.mxu0 0.0
    %260 = vmatpush1.xpose.msra.mxu0 0.0
    %261 = vmatprep.subr.mxu0 0.0
    %262 = vmatpush1.xpose.msra.mxu0 0.0
    %263 = vmatprep.subr.mxu0 0.0
    %264 = vmatpush1.xpose.msra.mxu0 0.0
    %265 = vmatprep.subr.mxu0 0.0
    %266 = vmatpush1.xpose.msra.mxu0 0.0
    %267 = vmatprep.subr.mxu0 0.0
    %268 = vmatpush1.xpose.msra.mxu0 0.0
    %269 = vmatprep.subr.mxu0 0.0
    %270 = vmatpush1.xpose.msra.mxu0 0.0
    %271 = vmatprep.subr.mxu0 0.0
    %272 = vmatpush1.xpose.msra.mxu0 0.0
    %273 = vmatprep.subr.mxu0 0.0
    %274 = vmatpush1.xpose.msra.mxu0 0.0
    %275 = vmatprep.subr.mxu0 0.0
    %276 = vmatpush1.xpose.msra.mxu0 0.0
    %277 = vmatprep.subr.mxu0 0.0
    %278 = vmatpush1.xpose.msra.mxu0 %v245
    %279 = vmatprep.subr.mxu0 0.0
    %280 = vmatpush2.xpose.msra.mxu0 0.0
    %281 = vmatprep.subr.mxu0 0.0
    %282 = vmatpush2.xpose.msra.mxu0 0.0
    %283 = vmatprep.subr.mxu0 0.0
    %284 = vmatpush2.xpose.msra.mxu0 0.0
    %285 = vmatprep.subr.mxu0 0.0
    %286 = vmatpush2.xpose.msra.mxu0 0.0
    %287 = vmatprep.subr.mxu0 0.0
    %288 = vmatpush2.xpose.msra.mxu0 0.0
    %289 = vmatprep.subr.mxu0 0.0
    %290 = vmatpush2.xpose.msra.mxu0 0.0
    %291 = vmatprep.subr.mxu0 0.0
    %292 = vmatpush2.xpose.msra.mxu0 0.0
    %293 = vmatprep.subr.mxu0 0.0
    %294 = vmatpush2.xpose.msra.mxu0 0.0
    %295 = vmatprep.subr.mxu0 0.0
    %296 = vmatpush2.xpose.msra.mxu0 0.0
    %297 = vmatprep.subr.mxu0 0.0
    %298 = vmatpush2.xpose.msra.mxu0 0.0
    %299 = vmatprep.subr.mxu0 0.0
    %300 = vmatpush2.xpose.msra.mxu0 0.0
    %301 = vmatprep.subr.mxu0 0.0
    %302 = vmatpush2.xpose.msra.mxu0 0.0
    %303 = vmatprep.subr.mxu0 0.0
    %304 = vmatpush2.xpose.msra.mxu0 0.0
    %305 = vmatprep.subr.mxu0 0.0
    %306 = vmatpush2.xpose.msra.mxu0 0.0
    %307 = vmatprep.subr.mxu0 0.0
    %308 = vmatpush2.xpose.msra.mxu0 0.0
    %309 = vmatprep.subr.mxu0 0.0
    %310 = vmatpush2.xpose.msra.mxu0 0.0
    %311 = vmatprep.mubr.f32.mxu0 0.0
    %312 = vmatmul.mubr.f32.gmra.mxu0 %v242
    %v313 = vpop.f32.mrf.mxu0
    %v314 = vadd.f32 %v240, %v313
    %v315 = vpop.f32.mrf.mxu0
    %316 = vdwg.mxu0
    %v317 = vtanh.pop %v314
    %vm318 = vcmask 57344
    %319 = vst.msk [vmem:[#allocation9] sm:$0x1] %vm318, %v317
    // Predicated region
    $region42: #{tpu_custom_call.1} parent=1 // pred_check
      _
    $region43: #{tpu_custom_call.1} parent=1 // pred_check_branch
      %321 = sbr.rel (0) target = $region45
    $region44: #{tpu_custom_call.1} parent=1 // pred_region
      %s323 = ssub.s32 16, 16
      %324 = vsyncadd [#allocation5], %s323
      %s326 = sshll.u32 [#allocation9], 4
      %s327 = int_to_ptr.vmem [resolvable:$true] %s326
      %329 = dma.vmem_to_hbm [thread:$0]  %s327, 16, %s7, [#allocation5]
    $region45: #{tpu_custom_call.1} parent=1 // pred_fallthru
      _
    // Predicated region
    $region46: #{tpu_custom_call.1} parent=1 // pred_check
      _
    $region47: #{tpu_custom_call.1} parent=1 // pred_check_branch
      %331 = sbr.rel (0) target = $region49
    $region48: #{tpu_custom_call.1} parent=1 // pred_region
      %332 = dma.done [#allocation5], 16
    $region49: #{tpu_custom_call.1} parent=1 // pred_fallthru
      _
    %333 = vsyncpa [#allocation4], 1
    %334 = vsyncpa [#allocation7], 1
    %335 = vsyncpa [#allocation5], 1

</llo_original>
